<compile_context>
chip_gen: v7x
topology: tpu7x:2x2x1
jax: 0.10.0
libtpu: 0.0.40
codegen_flags: <defaults>
</compile_context>

<pallas_src>
import jax
import jax.numpy as jnp
from jax.experimental import pallas as pl
from jax.experimental.pallas import tpu as pltpu


_VMEM_LIMIT_BYTES = 48 * 1024 * 1024       # safe on v5e/v6e (128 MiB) and v7x (64 MiB/TC)
_PIPELINE_BUDGET_BYTES = 16 << 20          # double-buffered in+out blocks stay ~16 MiB
_MAX_TILE_LANES = 32768
_MIN_TILE_LANES = 512
_MIN_GRID_STEPS = 4                        # >= 2 steps per TC on v7x megacore


# --------------------------------------------------------------- tile sizing
def _pick_tile_hw(hw, c_in, c_out, itemsize, n):
    """Pick the H*W (lane-axis) tile.

    Prefers the full extent (one contiguous NCHW DMA per batch element, no
    padded edge block) whenever the double-buffered input+output blocks fit
    the pipelined-VMEM budget; otherwise the largest multiple of 128 that
    does.  For v7x megacore, guarantees a few grid steps so both TensorCores
    get work, but never shrinks tiles below 512 lanes."""
    per_lane_bytes = (c_in + c_out) * itemsize
    max_lanes = _PIPELINE_BUDGET_BYTES // max(1, 2 * per_lane_bytes)
    max_lanes = max(128, (max_lanes // 128) * 128)
    cap = min(_MAX_TILE_LANES, max_lanes)

    tile = hw if hw <= cap else cap

    # v7x: avoid collapsing the grid to < _MIN_GRID_STEPS total steps when the
    # spatial extent is large enough to split without losing lane density.
    steps = n * (-(-hw // tile))
    if steps < _MIN_GRID_STEPS:
        want = -(-_MIN_GRID_STEPS // n)                     # hw-tiles wanted
        if hw >= _MIN_TILE_LANES * want:
            tile = max(_MIN_TILE_LANES, ((hw // want) // 128) * 128)
    return tile


# ---------------------------------------------------------------- conv kernel
def _conv1x1_kernel(w_ref, b_ref, x_ref, o_ref):
    # w: [c_out, c_in] f32, b: [c_out, 1] f32, x: [c_in, T], o: [c_out, T]
    acc = jnp.dot(w_ref[...], x_ref[...].astype(jnp.float32),
                  preferred_element_type=jnp.float32)
    o_ref[...] = (acc + b_ref[...]).astype(o_ref.dtype)


def _conv1x1_nchw(x3, w, b):
    # x3: [N, C_in, HW], w: [C_out, C_in] f32, b: [C_out] f32
    n, c_in, hw = x3.shape
    c_out = w.shape[0]
    itemsize = jnp.dtype(x3.dtype).itemsize

    if hw < 128:
        # Tiny spatial dim: lane-masked stores dominate; plain XLA is better.
        return (jnp.einsum("oc,nct->not", w, x3.astype(jnp.float32))
                + b[None, :, None]).astype(x3.dtype)

    tile = _pick_tile_hw(hw, c_in, c_out, itemsize, n)
    grid = (n, pl.cdiv(hw, tile))
    b2 = b.reshape(c_out, 1)

    # NOTE: if hw % tile != 0, the last block reads padded garbage lanes; each
    # output lane depends only on its own input lane (contraction is over
    # channels) and out-of-range lanes are never written back, so this is safe.
    # This reasoning breaks if any cross-lane op (e.g. spatial reduction) is
    # ever added to this kernel.
    cost = pl.CostEstimate(
        flops=2 * n * hw * c_in * c_out,
        bytes_accessed=(c_in + c_out) * n * hw * itemsize + (c_out * c_in + c_out) * 4,
        transcendentals=0,
    )
    return pl.pallas_call(
        _conv1x1_kernel,
        out_shape=jax.ShapeDtypeStruct((n, c_out, hw), x3.dtype),
        grid_spec=pltpu.PrefetchScalarGridSpec(
            num_scalar_prefetch=0,
            grid=grid,
            in_specs=[
                pl.BlockSpec((c_out, c_in), lambda i, j: (0, 0)),        # weight (resident)
                pl.BlockSpec((c_out, 1), lambda i, j: (0, 0)),           # bias   (resident)
                pl.BlockSpec((None, c_in, tile), lambda i, j: (i, 0, j)),
            ],
            out_specs=pl.BlockSpec((None, c_out, tile), lambda i, j: (i, 0, j)),
        ),
        compiler_params=pltpu.CompilerParams(
            dimension_semantics=("parallel", "parallel"),
            vmem_limit_bytes=_VMEM_LIMIT_BYTES,
        ),
        cost_estimate=cost,
    )(w, b2, x3)


# ----------------------------------------------------------------- pad kernel
def _pad_kernel(x_ref, o_ref):
    # x: [c_in, T], o: [c_out, T] -- two disjoint lane-dense stores, no concat
    # temporary / XLU shuffle.
    c_in = x_ref.shape[0]
    c_out = o_ref.shape[0]
    o_ref[0:c_in, :] = x_ref[...].astype(o_ref.dtype)
    o_ref[c_in:c_out, :] = jnp.zeros((c_out - c_in, o_ref.shape[1]), dtype=o_ref.dtype)


def _pad_channels_nchw(x3, c_out):
    # x3: [N, C_in, HW] -> [N, C_out, HW] with zero-padded channels.
    n, c_in, hw = x3.shape
    itemsize = jnp.dtype(x3.dtype).itemsize

    if hw < 128:
        # Tiny spatial dim: fall back to XLA (avoids masked partial stores).
        return jnp.pad(x3, ((0, 0), (0, c_out - c_in), (0, 0)))

    tile = _pick_tile_hw(hw, c_in, c_out, itemsize, n)
    grid = (n, pl.cdiv(hw, tile))
    cost = pl.CostEstimate(
        flops=0,
        bytes_accessed=(c_in + c_out) * n * hw * itemsize,
        transcendentals=0,
    )
    return pl.pallas_call(
        _pad_kernel,
        out_shape=jax.ShapeDtypeStruct((n, c_out, hw), x3.dtype),
        grid_spec=pltpu.PrefetchScalarGridSpec(
            num_scalar_prefetch=0,
            grid=grid,
            in_specs=[pl.BlockSpec((None, c_in, tile), lambda i, j: (i, 0, j))],
            out_specs=pl.BlockSpec((None, c_out, tile), lambda i, j: (i, 0, j)),
        ),
        compiler_params=pltpu.CompilerParams(
            dimension_semantics=("parallel", "parallel"),
            vmem_limit_bytes=_VMEM_LIMIT_BYTES,
        ),
        cost_estimate=cost,
    )(x3)


# ---------------------------------------------------------------- Align class
class Align:
    """JAX/Pallas re-implementation of the PyTorch Align module (NCHW)."""

    def __init__(self, c_in, c_out, key=None):
        self.c_in = c_in
        self.c_out = c_out
        if c_in > c_out:
            if key is None:
                key = jax.random.PRNGKey(0)
            kw, kb = jax.random.split(key)
            # PyTorch Conv2d(c_in, c_out, 1): weight [c_out, c_in, 1, 1], bias [c_out]
            bound = 1.0 / (c_in ** 0.5)
            self.weight = jax.random.uniform(
                kw, (c_out, c_in), jnp.float32, -bound, bound)   # left-multiply form
            self.bias = jax.random.uniform(
                kb, (c_out,), jnp.float32, -bound, bound)

    def __call__(self, x):
        # x: NCHW
        n, c, h, w = x.shape
        assert c == self.c_in
        if self.c_in == self.c_out:
            return x
        hw = h * w
        x3 = x.reshape(n, c, hw)  # free view, stays NCHW — no transposes
        if self.c_in > self.c_out:
            # Parameters stay f32 inside the kernel (f32 accumulation).
            y3 = _conv1x1_nchw(x3, self.weight, self.bias)
        else:
            y3 = _pad_channels_nchw(x3, self.c_out)
        return y3.reshape(n, self.c_out, h, w)


# ---------------------------------------------------------------------- main
if __name__ == "__main__":
    key = jax.random.PRNGKey(0)
    kx, kparam = jax.random.split(key)

    N, C_IN, H, W = 2, 8, 16, 16
    x = jax.random.normal(kx, (N, C_IN, H, W), jnp.float32)

    # Case 1: c_in > c_out  -> 1x1 conv (Pallas NCHW matmul kernel)
    align_conv = Align(C_IN, 4, key=kparam)
    y_conv = jax.block_until_ready(align_conv(x))
    ref_conv = (
        jnp.einsum("nchw,oc->nohw", x, align_conv.weight)
        + align_conv.bias[None, :, None, None]
    )
    assert y_conv.shape == (N, 4, H, W)
    assert jnp.allclose(y_conv, ref_conv, atol=1e-4, rtol=1e-4), "conv1x1 mismatch"

    # Case 2: c_in < c_out  -> zero-pad channels (Pallas pad kernel)
    align_pad = Align(C_IN, 12)
    y_pad = jax.block_until_ready(align_pad(x))
    ref_pad = jnp.pad(x, ((0, 0), (0, 12 - C_IN), (0, 0), (0, 0)))
    assert y_pad.shape == (N, 12, H, W)
    assert jnp.allclose(y_pad, ref_pad), "channel pad mismatch"

    # Case 3: identity
    align_id = Align(C_IN, C_IN)
    y_id = jax.block_until_ready(align_id(x))
    assert jnp.allclose(y_id, x)

    print("KERNEL_OK")
</pallas_src>

<mosaic_0001>
module attributes {stable_mosaic.version = 11 : i64} {
  func.func @_conv1x1_kernel(%arg0: i32, %arg1: i32, %arg2: memref<4x8xf32, #tpu.memory_space<vmem>>, %arg3: memref<4x1xf32, #tpu.memory_space<vmem>>, %arg4: memref<1x8x256xf32, #tpu.memory_space<vmem>>, %arg5: memref<1x4x256xf32, #tpu.memory_space<vmem>>) attributes {dimension_semantics = [#tpu.dimension_semantics<parallel>, #tpu.dimension_semantics<parallel>], iteration_bounds = array<i64: 2, 1>, scalar_prefetch = 0 : i64, scratch_operands = 0 : i64, tpu.core_type = #tpu.core_type<tc>, window_params = [{pipeline_mode = #tpu.pipeline_mode<synchronous>, transform_indices = @transform_0, window_bounds = array<i64: 4, 8>}, {pipeline_mode = #tpu.pipeline_mode<synchronous>, transform_indices = @transform_1, window_bounds = array<i64: 4, 1>}, {transform_indices = @transform_2, window_bounds = array<i64: 1, 8, 256>}, {transform_indices = @transform_3, window_bounds = array<i64: 1, 4, 256>}]} {
    %c0 = arith.constant 0 : index
    %c0_0 = arith.constant 0 : index
    %0 = vector.load %arg2[%c0, %c0_0] : memref<4x8xf32, #tpu.memory_space<vmem>>, vector<4x8xf32>
    %c0_1 = arith.constant 0 : index
    %c0_2 = arith.constant 0 : index
    %c0_3 = arith.constant 0 : index
    %1 = vector.load %arg4[%c0_1, %c0_2, %c0_3] : memref<1x8x256xf32, #tpu.memory_space<vmem>>, vector<1x8x256xf32>
    %2 = vector.shape_cast %1 : vector<1x8x256xf32> to vector<8x256xf32>
    %cst = arith.constant dense<0.000000e+00> : vector<4x256xf32>
    %3 = tpu.matmul %0, %2, %cst {dimension_numbers = #tpu.dot_dimension_numbers<[1], [0], [0], [1], [0, 0, 1, 1], [], []>} : vector<4x8xf32>, vector<8x256xf32>, vector<4x256xf32> -> vector<4x256xf32>
    %c0_4 = arith.constant 0 : index
    %c0_5 = arith.constant 0 : index
    %4 = vector.load %arg3[%c0_4, %c0_5] : memref<4x1xf32, #tpu.memory_space<vmem>>, vector<4x1xf32>
    %5 = vector.broadcast %4 : vector<4x1xf32> to vector<4x256xf32>
    %6 = arith.addf %3, %5 : vector<4x256xf32>
    %c0_6 = arith.constant 0 : index
    %c0_7 = arith.constant 0 : index
    %c0_8 = arith.constant 0 : index
    %7 = vector.load %arg5[%c0_6, %c0_7, %c0_8] : memref<1x4x256xf32, #tpu.memory_space<vmem>>, vector<1x4x256xf32>
    %8 = vector.shape_cast %7 : vector<1x4x256xf32> to vector<4x256xf32>
    %9 = vector.shape_cast %6 : vector<4x256xf32> to vector<1x4x256xf32>
    tpu.vector_store %arg5[%c0_6, %c0_7, %c0_8], %9 {strides = array<i32>} : memref<1x4x256xf32, #tpu.memory_space<vmem>>, vector<1x4x256xf32>,
    return
  }
  func.func @transform_0(%arg0: i32, %arg1: i32) -> (i32, i32) {
    %c0_i32 = arith.constant 0 : i32
    %c0_i32_0 = arith.constant 0 : i32
    %c0_i32_1 = arith.constant 0 : i32
    return %c0_i32, %c0_i32_0 : i32, i32
  }
  func.func @transform_1(%arg0: i32, %arg1: i32) -> (i32, i32) {
    %c0_i32 = arith.constant 0 : i32
    %c0_i32_0 = arith.constant 0 : i32
    %c0_i32_1 = arith.constant 0 : i32
    return %c0_i32, %c0_i32_0 : i32, i32
  }
  func.func @transform_2(%arg0: i32, %arg1: i32) -> (i32, i32, i32) {
    %c0_i32 = arith.constant 0 : i32
    %c0_i32_0 = arith.constant 0 : i32
    return %arg0, %c0_i32, %arg1 : i32, i32, i32
  }
  func.func @transform_3(%arg0: i32, %arg1: i32) -> (i32, i32, i32) {
    %c0_i32 = arith.constant 0 : i32
    %c0_i32_0 = arith.constant 0 : i32
    return %arg0, %c0_i32, %arg1 : i32, i32, i32
  }
}

</mosaic_0001>

<llo_original>
// kernel: tpu_custom_call.1
$region0: #{tpu_custom_call.1}
  #allocation0 [shape = 'u32[]', space=smem, size = 0x4, offset = 0x4, fixed_abs, tag = 'smem constant byte address 0x4 - core index']
  #allocation1 [shape = 'u32[144,128]{1,0:T(1,128)}', space=vmem, size = 0x12000, scoped, tag = 'internal scratch']
  %s0 = inlined_call_operand.vmem [shape: f32[4,8], index: 0, kind: input, shape index: {}]
  %s1 = inlined_call_operand.vmem [shape: f32[4,1], index: 1, kind: input, shape index: {}]
  %s2 = inlined_call_operand.hbm [shape: f32[2,8,256], index: 2, kind: input, shape index: {}]
  %s3 = inlined_call_operand.hbm [shape: f32[2,4,256], index: 3, kind: output, shape index: {}]
  %s4 = sld [smem:[#allocation0]]
  $region49: #{tpu_custom_call.1} parent=0
    _
  %s6 = ssub.s32 1, %s4
  %s7 = scalar_select 0, %s6, %s4
  $region1: #{tpu_custom_call.1} parent=0
    #allocation2 [shape = 'u8[16384]{0}', space=vmem, size = 0x4000, scoped, tag = 'input window, operand 2']
    #allocation3 [shape = 's32[2]{0}', space=sflag, size = 0x8, scoped, tag = 'scoped memory for tpu_custom_call.1']
    #allocation4 [shape = 's32[2]{0}', space=sflag, size = 0x8, scoped, tag = 'scoped memory for tpu_custom_call.1']
    #allocation5 [shape = 'u8[8192]{0}', space=vmem, size = 0x2000, scoped, tag = 'output window, operand 0']
    %8 = vsyncpa [#allocation3], 0
    %s9 = scalar_lea.sflag [#allocation3], 1
    %10 = vsyncpa %s9, 0
    %11 = vsyncpa [#allocation4], 0
    %s12 = scalar_lea.sflag [#allocation4], 1
    %13 = vsyncpa %s12, 0
    loop: start=0, step=1, limit=4
    $region2: #{tpu_custom_call.1} parent=1 // loop_pre_header
      _
    $region3: #{tpu_custom_call.1} parent=1 // loop_header
      %s15 = sphi 0, %s19
      %p16 = scmp.ge.s32.totalorder %s15, 4
      %s22 = sphi 0, %s34
      %s23 = sphi 0, %s30
      %s24 = sphi 0, %s22
      %s25 = sphi 0, %s23
      %s26 = sphi 0, %s24
      %s27 = sphi 0, %s25
      %s35 = sphi 0, %s35
      %s37 = sphi 0, %s35
      %s38 = sphi 0, %s37
      %s52 = sphi 0, %s38
      %s56 = sphi 0, %s56
      %s58 = sphi 0, %s56
      %s59 = sphi 0, %s58
      %s73 = sphi 0, %s59
      %s81 = sphi 0, %s83
      %s84 = sphi 0, %s81
      %s85 = sphi 0, %s84
      %s101 = sphi 0, %s85
      %s109 = sphi 0, %s111
      %s112 = sphi 0, %s109
      %s113 = sphi 0, %s112
      %s129 = sphi 0, %s113
    $region4: #{tpu_custom_call.1} parent=1 // loop_header_branch
      %18 = sbr.rel (%p16) target = $region8
    $region5: #{tpu_custom_call.1} parent=1 // loop_body
      %s20 = ssub.s32 %s15, 1
      %s21 = ssub.s32 %s15, 2
      %s28 = sadd.s32 1, %s23
      %p29 = scmp.ge.s32.totalorder %s28, 1
      %s30 = scalar_select %p29, 0, %s28
      %s31 = sadd.s32 1, %s22
      %s32 = scalar_select %p29, %s31, %s22
      %p33 = scmp.ge.s32.totalorder %s32, 2
      %s34 = scalar_select %p33, 0, %s32
      %s36 = sadd.s32 %s35, 1
      %p39 = scmp.eq.s32.totalorder %s15, 1
      %p40 = scmp.ne.s32.totalorder %s35, %s37
      %p41 = scmp.eq.s32.totalorder %s15, 0
      %p42 = por %p40, %p41
      %p43 = scmp.ne.s32.totalorder %s35, %s37
      %p44 = scmp.eq.s32.totalorder %s20, 1
      %p45 = por %p43, %p44
      %p46 = scmp.ne.s32.totalorder %s37, %s38
      %p47 = scmp.eq.s32.totalorder %s20, 0
      %p48 = por %p46, %p47
      %p49 = scmp.ne.s32.totalorder %s37, %s38
      %p50 = scmp.eq.s32.totalorder %s21, 1
      %p51 = por %p49, %p50
      %p53 = scmp.ne.s32.totalorder %s38, %s52
      %p54 = scmp.eq.s32.totalorder %s21, 0
      %p55 = por %p53, %p54
      %s57 = sadd.s32 %s56, 1
      %p60 = scmp.eq.s32.totalorder %s15, 1
      %p61 = scmp.ne.s32.totalorder %s56, %s58
      %p62 = scmp.eq.s32.totalorder %s15, 0
      %p63 = por %p61, %p62
      %p64 = scmp.ne.s32.totalorder %s56, %s58
      %p65 = scmp.eq.s32.totalorder %s20, 1
      %p66 = por %p64, %p65
      %p67 = scmp.ne.s32.totalorder %s58, %s59
      %p68 = scmp.eq.s32.totalorder %s20, 0
      %p69 = por %p67, %p68
      %p70 = scmp.ne.s32.totalorder %s58, %s59
      %p71 = scmp.eq.s32.totalorder %s21, 1
      %p72 = por %p70, %p71
      %p74 = scmp.ne.s32.totalorder %s59, %s73
      %p75 = scmp.eq.s32.totalorder %s21, 0
      %p76 = por %p74, %p75
      %s77 = ssub.s32 %s22, %s34
      %s78 = ssub.s32 %s23, %s30
      %s79 = sor.u32 %s77, %s78
      %p80 = scmp.eq.s32.totalorder %s79, 0
      %s82 = sadd.s32 %s81, 1
      %s83 = scalar_select %p80, %s81, %s82
      %p86 = pneg %p80
      %p87 = scmp.eq.s32.totalorder %s15, 1
      %p88 = por %p86, %p87
      %p89 = scmp.ne.s32.totalorder %s81, %s84
      %p90 = scmp.eq.s32.totalorder %s15, 0
      %p91 = por %p89, %p90
      %p92 = scmp.ne.s32.totalorder %s81, %s84
      %p93 = scmp.eq.s32.totalorder %s20, 1
      %p94 = por %p92, %p93
      %p95 = scmp.ne.s32.totalorder %s84, %s85
      %p96 = scmp.eq.s32.totalorder %s20, 0
      %p97 = por %p95, %p96
      %p98 = scmp.ne.s32.totalorder %s84, %s85
      %p99 = scmp.eq.s32.totalorder %s21, 1
      %p100 = por %p98, %p99
      %p102 = scmp.ne.s32.totalorder %s85, %s101
      %p103 = scmp.eq.s32.totalorder %s21, 0
      %p104 = por %p102, %p103
      %s105 = ssub.s32 %s22, %s34
      %s106 = ssub.s32 %s23, %s30
      %s107 = sor.u32 %s105, %s106
      %p108 = scmp.eq.s32.totalorder %s107, 0
      %s110 = sadd.s32 %s109, 1
      %s111 = scalar_select %p108, %s109, %s110
      %p114 = pneg %p108
      %p115 = scmp.eq.s32.totalorder %s15, 1
      %p116 = por %p114, %p115
      %p117 = scmp.ne.s32.totalorder %s109, %s112
      %p118 = scmp.eq.s32.totalorder %s15, 0
      %p119 = por %p117, %p118
      %p120 = scmp.ne.s32.totalorder %s109, %s112
      %p121 = scmp.eq.s32.totalorder %s20, 1
      %p122 = por %p120, %p121
      %p123 = scmp.ne.s32.totalorder %s112, %s113
      %p124 = scmp.eq.s32.totalorder %s20, 0
      %p125 = por %p123, %p124
      %p126 = scmp.ne.s32.totalorder %s112, %s113
      %p127 = scmp.eq.s32.totalorder %s21, 1
      %p128 = por %p126, %p127
      %p130 = scmp.ne.s32.totalorder %s113, %s129
      %p131 = scmp.eq.s32.totalorder %s21, 0
      %p132 = por %p130, %p131
      %p133 = scmp.le.s32.totalorder 1, %s15
      %p134 = scmp.lt.s32.totalorder %s15, 3
      %p135 = pnand %p133, %p134
      %p136 = pneg %p135
      // Predicated region
      $region9: #{tpu_custom_call.1} parent=5 // pred_check
        _
      $region10: #{tpu_custom_call.1} parent=5 // pred_check_branch
        %138 = sbr.rel (%p135) target = $region12
      $region11: #{tpu_custom_call.1} parent=5 // pred_region
        %s139 = ssub.s32 %s15, 1
        // Predicated region
        $region13: #{tpu_custom_call.1} parent=11 // pred_check
          %p140 = pneg %p48
        $region14: #{tpu_custom_call.1} parent=11 // pred_check_branch
          %142 = sbr.rel (%p140) target = $region16
        $region15: #{tpu_custom_call.1} parent=11 // pred_region
          _
        $region16: #{tpu_custom_call.1} parent=11 // pred_fallthru
          _
        // Predicated region
        $region17: #{tpu_custom_call.1} parent=11 // pred_check
          %p143 = pneg %p69
        $region18: #{tpu_custom_call.1} parent=11 // pred_check_branch
          %145 = sbr.rel (%p143) target = $region20
        $region19: #{tpu_custom_call.1} parent=11 // pred_region
          _
        $region20: #{tpu_custom_call.1} parent=11 // pred_fallthru
          _
      $region12: #{tpu_custom_call.1} parent=5 // pred_fallthru
        _
      %p146 = scmp.lt.s32.totalorder %s15, 2
      // Predicated region
      $region21: #{tpu_custom_call.1} parent=5 // pred_check
        %p147 = pneg %p146
      $region22: #{tpu_custom_call.1} parent=5 // pred_check_branch
        %149 = sbr.rel (%p147) target = $region24
      $region23: #{tpu_custom_call.1} parent=5 // pred_region
        // Predicated region
        $region25: #{tpu_custom_call.1} parent=23 // pred_check
          %p150 = pneg %p91
        $region26: #{tpu_custom_call.1} parent=23 // pred_check_branch
          %152 = sbr.rel (%p150) target = $region28
        $region27: #{tpu_custom_call.1} parent=23 // pred_region
          %s153 = sand.u32 %s81, 1
          %s154 = scalar_lea.sflag [#allocation3], %s153
          %s155 = sand.u32 %s81, 1
          %s156 = smul.addr %s155, 16
          %s157 = scalar_lea.vmem [#allocation2], %s156
          %s158 = smul.u32 2, %s23
          %s160 = ssub.s32 256, 256
          %161 = vsyncadd %s154, %s160
          %s162 = smul.addr %s22, 2
          %s163 = sadd.s32 %s158, %s162
          %s164 = smul.addr %s163, 128
          %s165 = scalar_lea.hbm %s2, %s164
          %s167 = sshll.u32 %s157, 4
          %s168 = int_to_ptr.vmem [resolvable:$true] %s167
          %170 = dma.hbm_to_vmem [thread:$0]  %s165, 256, %s168, %s154
        $region28: #{tpu_custom_call.1} parent=23 // pred_fallthru
          _
      $region24: #{tpu_custom_call.1} parent=5 // pred_fallthru
        _
      %p171 = scmp.le.s32.totalorder 1, %s15
      %p172 = scmp.lt.s32.totalorder %s15, 3
      %p173 = pnand %p171, %p172
      %p174 = pneg %p173
      // Predicated region
      $region29: #{tpu_custom_call.1} parent=5 // pred_check
        _
      $region30: #{tpu_custom_call.1} parent=5 // pred_check_branch
        %176 = sbr.rel (%p173) target = $region32
      $region31: #{tpu_custom_call.1} parent=5 // pred_region
        %s177 = ssub.s32 %s15, 1
        %s178 = sand.u32 %s84, 1
        %s179 = scalar_lea.sflag [#allocation3], %s178
        %s180 = sand.u32 %s84, 1
        %s181 = smul.addr %s180, 16
        %s182 = scalar_lea.vmem [#allocation2], %s181
        // Predicated region
        $region33: #{tpu_custom_call.1} parent=31 // pred_check
          %p183 = pneg %p97
        $region34: #{tpu_custom_call.1} parent=31 // pred_check_branch
          %185 = sbr.rel (%p183) target = $region36
        $region35: #{tpu_custom_call.1} parent=31 // pred_region
          %186 = dma.done %s179, 256
        $region36: #{tpu_custom_call.1} parent=31 // pred_fallthru
          _
        %p187 = pneg %p48
        %p188 = pneg %p45
        %p189 = pneg %p69
        %p190 = pneg %p66
        %s191 = sand.u32 %s84, 1
        %s192 = scalar_lea.sflag [#allocation3], %s191
        %s193 = sand.u32 %s84, 1
        %s194 = smul.addr %s193, 16
        %s195 = scalar_lea.vmem [#allocation2], %s194
        %p196 = pneg %p97
        %p197 = pneg %p94
        %p198 = pneg %p125
        %p199 = pneg %p122
        %s200 = sand.u32 %s112, 1
        %s201 = scalar_lea.sflag [#allocation4], %s200
        %s202 = sand.u32 %s112, 1
        %s203 = smul.addr %s202, 8
        %s204 = scalar_lea.vmem [#allocation5], %s203
        %s205 = smul.u32 2, %s25
        %s206 = smul.u32 2, %s25
        %v207 = vld [vmem:[%s0] sm:$0xf]
        %v208 = vld [vmem:[%s182] sm:$0xff]
        %v209 = vld [vmem:[%s182 + $0x8] sm:$0xff]
        %v210 = vld [vmem:[%s1] sm:$0xf]
        %212 = vset.pattern.permute.xlu0 0
        %213 = vperm.xlu0 %212, %v210
        %v214 = vpop.permute.xlu0 %213
        %vm216 = vcmask 64512
        %v218 = vsel %vm216, %v207, 0
        %220 = vmatprep.subr.mxu0 %v209
        %221 = vmatpush1.msra.mxu0 %v208
        %222 = vmatprep.subr.mxu0 0.0
        %223 = vmatpush1.msra.mxu0 0.0
        %224 = vmatprep.subr.mxu0 0.0
        %225 = vmatpush1.msra.mxu0 0.0
        %226 = vmatprep.subr.mxu0 0.0
        %227 = vmatpush1.msra.mxu0 0.0
        %228 = vmatprep.subr.mxu0 0.0
        %229 = vmatpush1.msra.mxu0 0.0
        %230 = vmatprep.subr.mxu0 0.0
        %231 = vmatpush1.msra.mxu0 0.0
        %232 = vmatprep.subr.mxu0 0.0
        %233 = vmatpush1.msra.mxu0 0.0
        %234 = vmatprep.subr.mxu0 0.0
        %235 = vmatpush1.msra.mxu0 0.0
        %236 = vmatprep.subr.mxu0 0.0
        %237 = vmatpush1.msra.mxu0 0.0
        %238 = vmatprep.subr.mxu0 0.0
        %239 = vmatpush1.msra.mxu0 0.0
        %240 = vmatprep.subr.mxu0 0.0
        %241 = vmatpush1.msra.mxu0 0.0
        %242 = vmatprep.subr.mxu0 0.0
        %243 = vmatpush1.msra.mxu0 0.0
        %244 = vmatprep.subr.mxu0 0.0
        %245 = vmatpush1.msra.mxu0 0.0
        %246 = vmatprep.subr.mxu0 0.0
        %247 = vmatpush1.msra.mxu0 0.0
        %248 = vmatprep.subr.mxu0 0.0
        %249 = vmatpush1.msra.mxu0 0.0
        %250 = vmatprep.subr.mxu0 0.0
        %251 = vmatpush1.msra.mxu0 0.0
        %252 = vmatprep.subr.mxu0 0.0
        %253 = vmatpush1.msra.mxu0 0.0
        %254 = vmatprep.subr.mxu0 0.0
        %255 = vmatpush1.msra.mxu0 0.0
        %256 = vmatprep.subr.mxu0 0.0
        %257 = vmatpush1.msra.mxu0 0.0
        %258 = vmatprep.subr.mxu0 0.0
        %259 = vmatpush1.msra.mxu0 0.0
        %260 = vmatprep.subr.mxu0 0.0
        %261 = vmatpush1.msra.mxu0 0.0
        %262 = vmatprep.subr.mxu0 0.0
        %263 = vmatpush1.msra.mxu0 0.0
        %264 = vmatprep.subr.mxu0 0.0
        %265 = vmatpush1.msra.mxu0 0.0
        %266 = vmatprep.subr.mxu0 0.0
        %267 = vmatpush1.msra.mxu0 0.0
        %268 = vmatprep.subr.mxu0 0.0
        %269 = vmatpush1.msra.mxu0 0.0
        %270 = vmatprep.subr.mxu0 0.0
        %271 = vmatpush1.msra.mxu0 0.0
        %272 = vmatprep.subr.mxu0 0.0
        %273 = vmatpush1.msra.mxu0 0.0
        %274 = vmatprep.subr.mxu0 0.0
        %275 = vmatpush1.msra.mxu0 0.0
        %276 = vmatprep.subr.mxu0 0.0
        %277 = vmatpush1.msra.mxu0 0.0
        %278 = vmatprep.subr.mxu0 0.0
        %279 = vmatpush1.msra.mxu0 0.0
        %280 = vmatprep.subr.mxu0 0.0
        %281 = vmatpush1.msra.mxu0 0.0
        %282 = vmatprep.subr.mxu0 0.0
        %283 = vmatpush1.msra.mxu0 0.0
        %284 = vmatprep.mubr.f32.mxu0 0.0
        %285 = vmatmul.mubr.f32.gmra.mrb[0].mxu0 %v218
        %v286 = vpop.f32.mrb[0].mxu0
        %v287 = vadd.f32 %v214, %v286
        %v288 = vpop.f32.mrb[0].mxu0
        %v289 = vadd.f32 %v214, %v288
        %290 = vdwg.mxu0
        %v293 = vcombine.low %v287, %v289
        %295 = vst [vmem:[%s204] sm:$0xff] %v293
        %s296 = sand.u32 %s112, 1
        %s297 = scalar_lea.sflag [#allocation4], %s296
        %s298 = sand.u32 %s112, 1
        %s299 = smul.addr %s298, 8
        %s300 = scalar_lea.vmem [#allocation5], %s299
        // Predicated region
        $region37: #{tpu_custom_call.1} parent=31 // pred_check
          %p301 = pneg %p122
        $region38: #{tpu_custom_call.1} parent=31 // pred_check_branch
          %303 = sbr.rel (%p301) target = $region40
        $region39: #{tpu_custom_call.1} parent=31 // pred_region
          %s304 = smul.u32 2, %s25
          %s306 = ssub.s32 128, 128
          %307 = vsyncadd %s297, %s306
          %s308 = smul.addr %s24, 2
          %s309 = sadd.s32 %s304, %s308
          %s310 = smul.addr %s309, 64
          %s311 = scalar_lea.hbm %s3, %s310
          %s313 = sshll.u32 %s300, 4
          %s314 = int_to_ptr.vmem [resolvable:$true] %s313
          %316 = dma.vmem_to_hbm [thread:$0]  %s314, 128, %s311, %s297
        $region40: #{tpu_custom_call.1} parent=31 // pred_fallthru
          _
      $region32: #{tpu_custom_call.1} parent=5 // pred_fallthru
        _
      %p317 = scmp.le.s32.totalorder 2, %s15
      // Predicated region
      $region41: #{tpu_custom_call.1} parent=5 // pred_check
        %p318 = pneg %p317
      $region42: #{tpu_custom_call.1} parent=5 // pred_check_branch
        %320 = sbr.rel (%p318) target = $region44
      $region43: #{tpu_custom_call.1} parent=5 // pred_region
        %s321 = ssub.s32 %s15, 2
        // Predicated region
        $region45: #{tpu_custom_call.1} parent=43 // pred_check
          %p322 = pneg %p128
        $region46: #{tpu_custom_call.1} parent=43 // pred_check_branch
          %324 = sbr.rel (%p322) target = $region48
        $region47: #{tpu_custom_call.1} parent=43 // pred_region
          %s325 = sand.u32 %s113, 1
          %s326 = scalar_lea.sflag [#allocation4], %s325
          %s327 = sand.u32 %s113, 1
          %s328 = smul.addr %s327, 8
          %s329 = scalar_lea.vmem [#allocation5], %s328
          %330 = dma.done %s326, 128
        $region48: #{tpu_custom_call.1} parent=43 // pred_fallthru
          _
      $region44: #{tpu_custom_call.1} parent=5 // pred_fallthru
        _
    $region6: #{tpu_custom_call.1} parent=1 // loop_footer
      %s19 = sadd.s32 1, %s15
    $region7: #{tpu_custom_call.1} parent=1 // loop_footer_branch
      %14 = sbr.rel target = $region3
    $region8: #{tpu_custom_call.1} parent=1 // loop_exit
      _
    %331 = vsyncpa [#allocation3], 1
    %s332 = scalar_lea.sflag [#allocation3], 1
    %333 = vsyncpa %s332, 1
    %334 = vsyncpa [#allocation4], 1
    %s335 = scalar_lea.sflag [#allocation4], 1
    %336 = vsyncpa %s335, 1

</llo_original>
